<compile_context>
chip_gen: v7x
topology: tpu7x:2x2x1
jax: 0.10.0
libtpu: 0.0.40
codegen_flags: <defaults>
</compile_context>

<pallas_src>
import functools

import jax
import jax.numpy as jnp
from jax.experimental import pallas as pl
from jax.experimental.pallas import tpu as pltpu

LANES = 128
ACC_ROWS = 256                            # fixed small f32 accumulator (128 KiB)
TILE_BYTES_PER_STEP = 8 * 1024 * 1024     # ~8 MiB of HBM traffic per grid step
VMEM_LIMIT_BYTES = 40 * 1024 * 1024       # > v5e 16 MiB scoped default, < v7x 64 MiB physical


def _sublane_multiple(dtype) -> int:
    # Native sublane packing: 8 rows for 4-byte, 16 for 2-byte, 32 for 1-byte dtypes.
    return max(8, 32 // jnp.dtype(dtype).itemsize)


def _mse_kernel(x_ref, t_ref, out_ref, acc_ref, *, tile_rows, rows_total,
                tiles_per_half, acc_rows, could_be_partial):
    i = pl.program_id(0)          # "parallel" half (sharded across TCs on v7x)
    j = pl.program_id(1)          # "arbitrary" streaming / reduction axis

    @pl.when(j == 0)
    def _():
        acc_ref[...] = jnp.zeros_like(acc_ref)

    # Stream inputs in their storage dtype; do the math in f32.
    d = x_ref[...].astype(jnp.float32) - t_ref[...].astype(jnp.float32)
    sq = d * d

    chunks = tile_rows // acc_rows

    def _fold_into_acc(vals):
        # Pure-VPU fold of the (tile_rows, 128) tile into the small accumulator.
        if chunks == 1:
            acc_ref[...] += vals
        else:
            acc_ref[...] += jnp.sum(vals.reshape(chunks, acc_rows, LANES), axis=0)

    if could_be_partial:
        row0 = (i * tiles_per_half + j) * tile_rows

        @pl.when(row0 + tile_rows <= rows_total)
        def _():
            _fold_into_acc(sq)

        @pl.when(row0 + tile_rows > rows_total)
        def _():
            # Partial (or phantom) tile: rows beyond rows_total hold undefined data
            # (possibly NaN/Inf) -> mask with a select, never with a multiply.
            local = jax.lax.broadcasted_iota(jnp.int32, sq.shape, 0)
            _fold_into_acc(jnp.where(row0 + local < rows_total, sq, 0.0))
    else:
        _fold_into_acc(sq)

    @pl.when(j == pl.num_programs(1) - 1)
    def _():
        # Lane-dense (8, 128) partial per half; no in-kernel cross-lane XLU reduce.
        if acc_rows == 8:
            folded = acc_ref[...]
        else:
            folded = jnp.sum(acc_ref[...].reshape(acc_rows // 8, 8, LANES), axis=0)
        out_ref[...] = folded.reshape(1, 8, LANES)


def content_loss(x, target):
    """ContentLoss.forward: returns (input, mse_loss(input, target))."""
    assert x.shape == target.shape, "input / target shape mismatch"
    n = x.size
    inv_n = 1.0 / float(n)

    xf = x.reshape(-1)
    tf = target.reshape(-1)

    sub = max(_sublane_multiple(x.dtype), _sublane_multiple(target.dtype))
    rows_main = (n // LANES // sub) * sub          # sublane-aligned slab rows
    main_elems = rows_main * LANES
    rem_elems = n - main_elems

    # Small tail (< sublane*128 + 128 elements): plain jnp, added to the kernel sum.
    tail_sum = 0.0
    if rem_elems:
        dt = xf[main_elems:].astype(jnp.float32) - tf[main_elems:].astype(jnp.float32)
        tail_sum = jnp.sum(dt * dt)

    if rows_main == 0:
        return x, jnp.float32(tail_sum) * inv_n

    if rem_elems:
        # Misaligned n: a single prefix slice (cheaper than padding both inputs).
        x2 = xf[:main_elems].reshape(rows_main, LANES)
        t2 = tf[:main_elems].reshape(rows_main, LANES)
    else:
        # Aligned n: pure metadata reshape, zero extra HBM traffic.
        x2 = xf.reshape(rows_main, LANES)
        t2 = tf.reshape(rows_main, LANES)

    # Tile sizing: target ~8 MiB of HBM traffic per grid step (both inputs).
    bytes_per_row = LANES * (jnp.dtype(x.dtype).itemsize + jnp.dtype(target.dtype).itemsize)
    max_rows = max(ACC_ROWS, (TILE_BYTES_PER_STEP // bytes_per_row) // ACC_ROWS * ACC_ROWS)
    tile_rows = max_rows if rows_main >= max_rows else rows_main   # always a multiple of 8

    tiles_total = pl.cdiv(rows_main, tile_rows)
    num_splits = 2 if tiles_total >= 2 else 1          # shard the stream across v7x's 2 TCs
    tiles_per_half = pl.cdiv(tiles_total, num_splits)
    acc_rows = ACC_ROWS if tile_rows % ACC_ROWS == 0 else 8
    could_be_partial = (rows_main % tile_rows != 0) or (num_splits * tiles_per_half != tiles_total)

    def in_index(i, j):
        # Clamp so a phantom step (odd tile count split across 2 halves) stays in
        # bounds; its contribution is fully masked out in-kernel.
        return (jnp.minimum(i * tiles_per_half + j, tiles_total - 1), 0)

    kernel = functools.partial(
        _mse_kernel, tile_rows=tile_rows, rows_total=rows_main,
        tiles_per_half=tiles_per_half, acc_rows=acc_rows,
        could_be_partial=could_be_partial)

    partials = pl.pallas_call(
        kernel,
        out_shape=jax.ShapeDtypeStruct((num_splits, 8, LANES), jnp.float32),
        grid_spec=pltpu.PrefetchScalarGridSpec(
            num_scalar_prefetch=0,
            grid=(num_splits, tiles_per_half),
            in_specs=[
                pl.BlockSpec((tile_rows, LANES), in_index),
                pl.BlockSpec((tile_rows, LANES), in_index),
            ],
            out_specs=pl.BlockSpec((1, 8, LANES), lambda i, j: (i, 0, 0)),
            scratch_shapes=[pltpu.VMEM((acc_rows, LANES), jnp.float32)],
        ),
        compiler_params=pltpu.CompilerParams(
            dimension_semantics=("parallel", "arbitrary"),
            vmem_limit_bytes=VMEM_LIMIT_BYTES),
        cost_estimate=pl.CostEstimate(
            flops=3 * n,
            transcendentals=0,
            bytes_accessed=x2.nbytes + t2.nbytes + num_splits * 8 * LANES * 4),
    )(x2, t2)

    loss = (jnp.sum(partials) + tail_sum) * inv_n
    # Identity pass-through (matches `return input` in the PyTorch module).
    return x, loss


if __name__ == "__main__":
    key = jax.random.PRNGKey(0)
    kx, kt, kx2, kt2 = jax.random.split(key, 4)

    # NCHW activation, small shapes: batch=2, channels=4, spatial=16.
    x = jax.random.normal(kx, (2, 4, 16, 16), dtype=jnp.float32)
    # "target" is the detached activation captured at module construction time.
    target = jax.random.normal(kt, (2, 4, 16, 16), dtype=jnp.float32)

    out, loss = content_loss(x, target)
    out = jax.block_until_ready(out)
    loss = jax.block_until_ready(loss)

    ref_loss = jnp.mean((x - target) ** 2)
    assert jnp.allclose(loss, ref_loss, rtol=1e-5, atol=1e-6), (loss, ref_loss)
    assert jnp.array_equal(out, x)

    # Awkward (non-128-divisible) activation shape: exercises the no-pad slab,
    # sublane-aligned main block and the plain-jnp remainder path.
    xb = jax.random.normal(kx2, (2, 3, 17, 13), dtype=jnp.float32)
    tb = jax.random.normal(kt2, (2, 3, 17, 13), dtype=jnp.float32)
    outb, lossb = content_loss(xb, tb)
    lossb = jax.block_until_ready(lossb)
    refb = jnp.mean((xb - tb) ** 2)
    assert jnp.allclose(lossb, refb, rtol=1e-5, atol=1e-6), (lossb, refb)
    assert jnp.array_equal(outb, xb)

    print("KERNEL_OK")
</pallas_src>

<mosaic_0001>
module attributes {stable_mosaic.version = 11 : i64} {
  func.func @_mse_kernel(%arg0: i32, %arg1: i32, %arg2: memref<16x128xf32, #tpu.memory_space<vmem>>, %arg3: memref<16x128xf32, #tpu.memory_space<vmem>>, %arg4: memref<1x8x128xf32, #tpu.memory_space<vmem>>, %arg5: memref<8x128xf32, #tpu.memory_space<vmem>>) attributes {dimension_semantics = [#tpu.dimension_semantics<parallel>, #tpu.dimension_semantics<arbitrary>], iteration_bounds = array<i64: 1, 1>, scalar_prefetch = 0 : i64, scratch_operands = 1 : i64, tpu.core_type = #tpu.core_type<tc>, window_params = [{transform_indices = @transform_0, window_bounds = array<i64: 16, 128>}, {transform_indices = @transform_1, window_bounds = array<i64: 16, 128>}, {transform_indices = @transform_2, window_bounds = array<i64: 1, 8, 128>}]} {
    %c0_i32 = arith.constant 0 : i32
    %0 = arith.cmpi eq, %arg1, %c0_i32 : i32
    %1 = arith.extui %0 : i1 to i32
    %c0_i32_0 = arith.constant 0 : i32
    %2 = arith.cmpi ne, %1, %c0_i32_0 : i32
    scf.if %2 {
      %cst_10 = arith.constant 0.000000e+00 : f32
      %15 = vector.broadcast %cst_10 : f32 to vector<8x128xf32>
      %c0_11 = arith.constant 0 : index
      %c0_12 = arith.constant 0 : index
      %16 = vector.load %arg5[%c0_11, %c0_12] : memref<8x128xf32, #tpu.memory_space<vmem>>, vector<8x128xf32>
      tpu.vector_store %arg5[%c0_11, %c0_12], %15 {strides = array<i32>} : memref<8x128xf32, #tpu.memory_space<vmem>>, vector<8x128xf32>,
    } else {
    }
    %c0 = arith.constant 0 : index
    %c0_1 = arith.constant 0 : index
    %3 = vector.load %arg2[%c0, %c0_1] : memref<16x128xf32, #tpu.memory_space<vmem>>, vector<16x128xf32>
    %c0_2 = arith.constant 0 : index
    %c0_3 = arith.constant 0 : index
    %4 = vector.load %arg3[%c0_2, %c0_3] : memref<16x128xf32, #tpu.memory_space<vmem>>, vector<16x128xf32>
    %5 = arith.subf %3, %4 : vector<16x128xf32>
    %6 = arith.mulf %5, %5 : vector<16x128xf32>
    %c0_4 = arith.constant 0 : index
    %c0_5 = arith.constant 0 : index
    %7 = vector.load %arg5[%c0_4, %c0_5] : memref<8x128xf32, #tpu.memory_space<vmem>>, vector<8x128xf32>
    %8 = vector.shape_cast %6 : vector<16x128xf32> to vector<2x8x128xf32>
    %cst = arith.constant dense<0.000000e+00> : vector<8x128xf32>
    %9 = vector.multi_reduction <add>, %8, %cst [0] : vector<2x8x128xf32> to vector<8x128xf32>
    %10 = arith.addf %7, %9 : vector<8x128xf32>
    %c0_6 = arith.constant 0 : index
    %c0_7 = arith.constant 0 : index
    %11 = vector.load %arg5[%c0_6, %c0_7] : memref<8x128xf32, #tpu.memory_space<vmem>>, vector<8x128xf32>
    tpu.vector_store %arg5[%c0_6, %c0_7], %10 {strides = array<i32>} : memref<8x128xf32, #tpu.memory_space<vmem>>, vector<8x128xf32>,
    %c0_i32_8 = arith.constant 0 : i32
    %12 = arith.cmpi eq, %arg1, %c0_i32_8 : i32
    %13 = arith.extui %12 : i1 to i32
    %c0_i32_9 = arith.constant 0 : i32
    %14 = arith.cmpi ne, %13, %c0_i32_9 : i32
    scf.if %14 {
      %c0_10 = arith.constant 0 : index
      %c0_11 = arith.constant 0 : index
      %15 = vector.load %arg5[%c0_10, %c0_11] : memref<8x128xf32, #tpu.memory_space<vmem>>, vector<8x128xf32>
      %16 = vector.shape_cast %15 : vector<8x128xf32> to vector<1x8x128xf32>
      %c0_12 = arith.constant 0 : index
      %c0_13 = arith.constant 0 : index
      %c0_14 = arith.constant 0 : index
      %17 = vector.load %arg4[%c0_12, %c0_13, %c0_14] : memref<1x8x128xf32, #tpu.memory_space<vmem>>, vector<1x8x128xf32>
      tpu.vector_store %arg4[%c0_12, %c0_13, %c0_14], %16 {strides = array<i32>} : memref<1x8x128xf32, #tpu.memory_space<vmem>>, vector<1x8x128xf32>,
    } else {
    }
    return
  }
  func.func @transform_0(%arg0: i32, %arg1: i32) -> (i32, i32) {
    %c1_i32 = arith.constant 1 : i32
    %0 = arith.muli %arg0, %c1_i32 : i32
    %1 = arith.addi %0, %arg1 : i32
    %c0_i32 = arith.constant 0 : i32
    %2 = arith.minsi %1, %c0_i32 : i32
    %c0_i32_0 = arith.constant 0 : i32
    %c0_i32_1 = arith.constant 0 : i32
    return %2, %c0_i32_0 : i32, i32
  }
  func.func @transform_1(%arg0: i32, %arg1: i32) -> (i32, i32) {
    %c1_i32 = arith.constant 1 : i32
    %0 = arith.muli %arg0, %c1_i32 : i32
    %1 = arith.addi %0, %arg1 : i32
    %c0_i32 = arith.constant 0 : i32
    %2 = arith.minsi %1, %c0_i32 : i32
    %c0_i32_0 = arith.constant 0 : i32
    %c0_i32_1 = arith.constant 0 : i32
    return %2, %c0_i32_0 : i32, i32
  }
  func.func @transform_2(%arg0: i32, %arg1: i32) -> (i32, i32, i32) {
    %c0_i32 = arith.constant 0 : i32
    %c0_i32_0 = arith.constant 0 : i32
    %c0_i32_1 = arith.constant 0 : i32
    return %arg0, %c0_i32, %c0_i32_0 : i32, i32, i32
  }
}

</mosaic_0001>

<llo_original>
// kernel: tpu_custom_call.1
$region0: #{tpu_custom_call.1}
  #allocation0 [shape = 'u32[]', space=smem, size = 0x4, offset = 0x4, fixed_abs, tag = 'smem constant byte address 0x4 - core index']
  #allocation1 [shape = 'u32[144,128]{1,0:T(1,128)}', space=vmem, size = 0x12000, scoped, tag = 'internal scratch']
  #allocation2 [shape = 'f32[8,128]{1,0:T(8,128)}', space=vmem, size = 0x1000, scoped, tag = 'scratch operand']
  %s0 = inlined_call_operand.hbm [shape: f32[16,128], index: 0, kind: input, shape index: {}]
  %s1 = inlined_call_operand.hbm [shape: f32[16,128], index: 1, kind: input, shape index: {}]
  %s2 = inlined_call_operand.hbm [shape: f32[1,8,128], index: 2, kind: output, shape index: {}]
  %s3 = sld [smem:[#allocation0]]
  $region34: #{tpu_custom_call.1} parent=0
    _
  %s5 = ssub.s32 1, %s3
  %s6 = scalar_select 0, %s5, %s3
  $region1: #{tpu_custom_call.1} parent=0
    #allocation3 [shape = 'u8[8192]{0}', space=vmem, size = 0x2000, scoped, tag = 'input window, operand 0, single buffered']
    #allocation4 [shape = 's32[1]{0}', space=sflag, size = 0x4, scoped, tag = 'scoped memory for tpu_custom_call.1']
    #allocation5 [shape = 's32[1]{0}', space=sflag, size = 0x4, scoped, tag = 'scoped memory for tpu_custom_call.1']
    #allocation6 [shape = 'u8[8192]{0}', space=vmem, size = 0x2000, scoped, tag = 'input window, operand 1, single buffered']
    #allocation7 [shape = 's32[1]{0}', space=sflag, size = 0x4, scoped, tag = 'scoped memory for tpu_custom_call.1']
    #allocation8 [shape = 'u8[4096]{0}', space=vmem, size = 0x1000, scoped, tag = 'output window, operand 0, single buffered']
    %7 = vsyncpa [#allocation4], 0
    %8 = vsyncpa [#allocation7], 0
    %9 = vsyncpa [#allocation5], 0
    // Predicated region
    $region2: #{tpu_custom_call.1} parent=1 // pred_check
      _
    $region3: #{tpu_custom_call.1} parent=1 // pred_check_branch
      %11 = sbr.rel (0) target = $region5
    $region4: #{tpu_custom_call.1} parent=1 // pred_region
      %s12 = sadd.s32 0, 0
      %p13 = scmp.lt.s32.totalorder %s12, 0
      %s14 = scalar_select %p13, %s12, 0
      %s15 = smul.u32 2, %s14
      %s17 = ssub.s32 256, 256
      %18 = vsyncadd [#allocation4], %s17
      %s19 = smul.addr %s15, 128
      %s20 = scalar_lea.hbm %s0, %s19
      %s21 = sshll.u32 [#allocation3], 4
      %s22 = int_to_ptr.vmem [resolvable:$true] %s21
      %27 = dma.hbm_to_vmem [thread:$0]  %s20, 256, %s22, [#allocation4], 128, 128, 8
    $region5: #{tpu_custom_call.1} parent=1 // pred_fallthru
      _
    // Predicated region
    $region6: #{tpu_custom_call.1} parent=1 // pred_check
      _
    $region7: #{tpu_custom_call.1} parent=1 // pred_check_branch
      %29 = sbr.rel (0) target = $region9
    $region8: #{tpu_custom_call.1} parent=1 // pred_region
      %s30 = sadd.s32 0, 0
      %p31 = scmp.lt.s32.totalorder %s30, 0
      %s32 = scalar_select %p31, %s30, 0
      %s33 = smul.u32 2, %s32
      %s35 = ssub.s32 256, 256
      %36 = vsyncadd [#allocation7], %s35
      %s37 = smul.addr %s33, 128
      %s38 = scalar_lea.hbm %s1, %s37
      %s39 = sshll.u32 [#allocation6], 4
      %s40 = int_to_ptr.vmem [resolvable:$true] %s39
      %45 = dma.hbm_to_vmem [thread:$0]  %s38, 256, %s40, [#allocation7], 128, 128, 8
    $region9: #{tpu_custom_call.1} parent=1 // pred_fallthru
      _
    // Predicated region
    $region10: #{tpu_custom_call.1} parent=1 // pred_check
      _
    $region11: #{tpu_custom_call.1} parent=1 // pred_check_branch
      %47 = sbr.rel (0) target = $region13
    $region12: #{tpu_custom_call.1} parent=1 // pred_region
      %48 = dma.done [#allocation4], 256
    $region13: #{tpu_custom_call.1} parent=1 // pred_fallthru
      _
    // Predicated region
    $region14: #{tpu_custom_call.1} parent=1 // pred_check
      _
    $region15: #{tpu_custom_call.1} parent=1 // pred_check_branch
      %50 = sbr.rel (0) target = $region17
    $region16: #{tpu_custom_call.1} parent=1 // pred_region
      %51 = dma.done [#allocation7], 256
    $region17: #{tpu_custom_call.1} parent=1 // pred_fallthru
      _
    %s52 = sadd.s32 0, 0
    %p53 = scmp.lt.s32.totalorder %s52, 0
    %s54 = scalar_select %p53, %s52, 0
    %s55 = smul.u32 2, %s54
    %s56 = sadd.s32 0, 0
    %p57 = scmp.lt.s32.totalorder %s56, 0
    %s58 = scalar_select %p57, %s56, 0
    %s59 = smul.u32 2, %s58
    %p60 = scmp.eq.s32.totalorder 0, 0
    // Predicated region
    $region18: #{tpu_custom_call.1} parent=1 // pred_check
      %p61 = pneg %p60
    $region19: #{tpu_custom_call.1} parent=1 // pred_check_branch
      %63 = sbr.rel (%p61) target = $region21
    $region20: #{tpu_custom_call.1} parent=1 // pred_region
      %64 = vst [vmem:[#allocation2] sm:$0xff] 0.0
    $region21: #{tpu_custom_call.1} parent=1 // pred_fallthru
      _
    %v65 = vld [vmem:[#allocation3] sm:$0xff]
    %v66 = vld [vmem:[#allocation3 + $0x8] sm:$0xff]
    %v67 = vld [vmem:[#allocation6] sm:$0xff]
    %v68 = vld [vmem:[#allocation6 + $0x8] sm:$0xff]
    %v69 = vsub.f32 %v65, %v67
    %v70 = vsub.f32 %v66, %v68
    %v71 = vmul.f32 %v69, %v69
    %v72 = vmul.f32 %v70, %v70
    %v73 = vld [vmem:[#allocation2] sm:$0xff]
    %v74 = vadd.f32 %v71, %v72
    %v75 = vadd.f32 %v73, %v74
    %76 = vst [vmem:[#allocation2] sm:$0xff] %v75
    // Predicated region
    $region22: #{tpu_custom_call.1} parent=1 // pred_check
      %p77 = pneg %p60
    $region23: #{tpu_custom_call.1} parent=1 // pred_check_branch
      %79 = sbr.rel (%p77) target = $region25
    $region24: #{tpu_custom_call.1} parent=1 // pred_region
      %v80 = vld [vmem:[#allocation2] sm:$0xff]
      %81 = vst [vmem:[#allocation8] sm:$0xff] %v80
    $region25: #{tpu_custom_call.1} parent=1 // pred_fallthru
      _
    // Predicated region
    $region26: #{tpu_custom_call.1} parent=1 // pred_check
      _
    $region27: #{tpu_custom_call.1} parent=1 // pred_check_branch
      %83 = sbr.rel (0) target = $region29
    $region28: #{tpu_custom_call.1} parent=1 // pred_region
      %s85 = ssub.s32 128, 128
      %86 = vsyncadd [#allocation5], %s85
      %s88 = sshll.u32 [#allocation8], 4
      %s89 = int_to_ptr.vmem [resolvable:$true] %s88
      %91 = dma.vmem_to_hbm [thread:$0]  %s89, 128, %s2, [#allocation5]
    $region29: #{tpu_custom_call.1} parent=1 // pred_fallthru
      _
    // Predicated region
    $region30: #{tpu_custom_call.1} parent=1 // pred_check
      _
    $region31: #{tpu_custom_call.1} parent=1 // pred_check_branch
      %93 = sbr.rel (0) target = $region33
    $region32: #{tpu_custom_call.1} parent=1 // pred_region
      %94 = dma.done [#allocation5], 128
    $region33: #{tpu_custom_call.1} parent=1 // pred_fallthru
      _
    %95 = vsyncpa [#allocation4], 1
    %96 = vsyncpa [#allocation7], 1
    %97 = vsyncpa [#allocation5], 1

</llo_original>
